<compile_context>
chip_gen: v7x
topology: tpu7x:2x2x1
jax: 0.10.0
libtpu: 0.0.40
codegen_flags: <defaults>
</compile_context>

<pallas_src>
import jax
import jax.numpy as jnp
from jax import lax
from jax.experimental import pallas as pl
from jax.experimental.pallas import tpu as pltpu

EPS = 1e-12


def output_layer_kernel(h_ref, x_ref, w_ref, b_ref, g_ref, beta_ref, o_ref):
    # h_ref, x_ref, o_ref: (TM, H)   w_ref: (H_out, H_in) torch layout
    # b_ref, g_ref, beta_ref: (1, H)
    #
    # Dense: hidden_states @ W^T + b.  Contract h's last dim with W's "in" dim
    # (axis 1) directly on the MXU in the operands' native dtype; accumulate f32.
    ctx = lax.dot_general(
        h_ref[...], w_ref[...],
        dimension_numbers=(((1,), (1,)), ((), ())),
        preferred_element_type=jnp.float32,
    )
    ctx = ctx + b_ref[...].astype(jnp.float32)

    # Dropout (eval mode): identity.

    # Residual add + LayerNorm over last dim, eps=1e-12 (f32 math).
    s = ctx + x_ref[...].astype(jnp.float32)
    mean = jnp.mean(s, axis=-1, keepdims=True)
    centered = s - mean
    var = jnp.mean(centered * centered, axis=-1, keepdims=True)
    # Fold gamma into the rsqrt scale (EUP rsqrt, one fewer full-tile multiply).
    scale = lax.rsqrt(var + EPS) * g_ref[...].astype(jnp.float32)
    out = centered * scale + beta_ref[...].astype(jnp.float32)
    o_ref[...] = out.astype(o_ref.dtype)


def _round_up(x, m):
    return ((x + m - 1) // m) * m


def output_layer(hidden_states, inputs, weight, bias, gamma, beta, *, tm=256):
    """hidden_states, inputs: (B, S, H) or (T, H). weight: (H, H) torch layout (out, in)."""
    orig_shape = hidden_states.shape
    H = orig_shape[-1]
    h2d = hidden_states.reshape(-1, H)
    x2d = inputs.reshape(-1, H)
    T = h2d.shape[0]

    # Pick an (8,128)-aligned token tile; shrink for small T so a tiny input
    # doesn't pay for a full 256-row tile of padded compute.
    tm_eff = min(tm, _round_up(T, 8))

    # Pad the token axis up to a multiple of the tile so every grid step uses a
    # full, aligned block (pad rows are benign — zeros through matmul/LN — and
    # are sliced off below).
    num_tiles = pl.cdiv(T, tm_eff)
    t_pad = num_tiles * tm_eff
    pad = t_pad - T
    if pad:
        h2d = jnp.pad(h2d, ((0, pad), (0, 0)))
        x2d = jnp.pad(x2d, ((0, pad), (0, 0)))

    b2d = bias.reshape(1, H)
    g2d = gamma.reshape(1, H)
    beta2d = beta.reshape(1, H)

    out = pl.pallas_call(
        output_layer_kernel,
        out_shape=jax.ShapeDtypeStruct((t_pad, H), hidden_states.dtype),
        grid_spec=pltpu.PrefetchScalarGridSpec(
            num_scalar_prefetch=0,
            grid=(num_tiles,),
            in_specs=[
                # Activation tiles: stream over the token axis (pipelined).
                pl.BlockSpec((tm_eff, H), lambda i: (i, 0)),
                pl.BlockSpec((tm_eff, H), lambda i: (i, 0)),
                # Parameters: same block every step -> VMEM-resident.
                pl.BlockSpec((H, H), lambda i: (0, 0)),
                pl.BlockSpec((1, H), lambda i: (0, 0)),
                pl.BlockSpec((1, H), lambda i: (0, 0)),
                pl.BlockSpec((1, H), lambda i: (0, 0)),
            ],
            out_specs=pl.BlockSpec((tm_eff, H), lambda i: (i, 0)),
        ),
        compiler_params=pltpu.CompilerParams(
            # Token tiles are independent -> shard across v7x's 2 TensorCores.
            dimension_semantics=("parallel",),
            # Explicit scoped-VMEM budget (fits v7x's 64 MiB per-TC VMEM).
            vmem_limit_bytes=64 * 1024 * 1024,
        ),
    )(h2d, x2d, weight, b2d, g2d, beta2d)

    if pad:
        out = out[:T]
    return out.reshape(orig_shape)


def reference(hidden_states, inputs, weight, bias, gamma, beta):
    ctx = jnp.einsum("...i,oi->...o", hidden_states, weight) + bias
    s = ctx + inputs
    mean = jnp.mean(s, axis=-1, keepdims=True)
    var = jnp.mean((s - mean) ** 2, axis=-1, keepdims=True)
    return (s - mean) / jnp.sqrt(var + EPS) * gamma + beta


if __name__ == "__main__":
    key = jax.random.PRNGKey(0)
    B, S, H = 2, 8, 32

    k_h, k_x, k_w, k_b = jax.random.split(key, 4)
    hidden_states = jax.random.normal(k_h, (B, S, H), dtype=jnp.float32)
    inputs = jax.random.normal(k_x, (B, S, H), dtype=jnp.float32)

    # Deterministic parameter init (nn.Linear shapes: weight (H, H), bias (H);
    # LayerNorm: gamma ones, beta zeros).
    bound = 1.0 / (H ** 0.5)
    weight = jax.random.uniform(k_w, (H, H), jnp.float32, -bound, bound)
    bias = jax.random.uniform(k_b, (H,), jnp.float32, -bound, bound)
    gamma = jnp.ones((H,), jnp.float32)
    beta = jnp.zeros((H,), jnp.float32)

    out = output_layer(hidden_states, inputs, weight, bias, gamma, beta)
    out = jax.block_until_ready(out)

    ref = reference(hidden_states, inputs, weight, bias, gamma, beta)
    assert out.shape == (B, S, H)
    assert jnp.allclose(out, ref, atol=1e-5, rtol=1e-5), "mismatch vs reference"

    print("KERNEL_OK")
</pallas_src>

<mosaic_0001>
module attributes {stable_mosaic.version = 11 : i64} {
  func.func @output_layer_kernel(%arg0: i32, %arg1: memref<16x32xf32, #tpu.memory_space<vmem>>, %arg2: memref<16x32xf32, #tpu.memory_space<vmem>>, %arg3: memref<32x32xf32, #tpu.memory_space<vmem>>, %arg4: memref<1x32xf32, #tpu.memory_space<vmem>>, %arg5: memref<1x32xf32, #tpu.memory_space<vmem>>, %arg6: memref<1x32xf32, #tpu.memory_space<vmem>>, %arg7: memref<16x32xf32, #tpu.memory_space<vmem>>) attributes {dimension_semantics = [#tpu.dimension_semantics<parallel>], iteration_bounds = array<i64: 1>, scalar_prefetch = 0 : i64, scratch_operands = 0 : i64, tpu.core_type = #tpu.core_type<tc>, window_params = [{transform_indices = @transform_0, window_bounds = array<i64: 16, 32>}, {transform_indices = @transform_1, window_bounds = array<i64: 16, 32>}, {pipeline_mode = #tpu.pipeline_mode<synchronous>, transform_indices = @transform_2, window_bounds = array<i64: 32, 32>}, {pipeline_mode = #tpu.pipeline_mode<synchronous>, transform_indices = @transform_3, window_bounds = array<i64: 1, 32>}, {pipeline_mode = #tpu.pipeline_mode<synchronous>, transform_indices = @transform_4, window_bounds = array<i64: 1, 32>}, {pipeline_mode = #tpu.pipeline_mode<synchronous>, transform_indices = @transform_5, window_bounds = array<i64: 1, 32>}, {transform_indices = @transform_6, window_bounds = array<i64: 16, 32>}]} {
    %c0 = arith.constant 0 : index
    %c0_0 = arith.constant 0 : index
    %0 = vector.load %arg1[%c0, %c0_0] : memref<16x32xf32, #tpu.memory_space<vmem>>, vector<16x32xf32>
    %c0_1 = arith.constant 0 : index
    %c0_2 = arith.constant 0 : index
    %1 = vector.load %arg3[%c0_1, %c0_2] : memref<32x32xf32, #tpu.memory_space<vmem>>, vector<32x32xf32>
    %cst = arith.constant dense<0.000000e+00> : vector<16x32xf32>
    %2 = tpu.matmul %0, %1, %cst {dimension_numbers = #tpu.dot_dimension_numbers<[1], [1], [0], [0], [0, 0, 1, 0], [], []>} : vector<16x32xf32>, vector<32x32xf32>, vector<16x32xf32> -> vector<16x32xf32>
    %c0_3 = arith.constant 0 : index
    %c0_4 = arith.constant 0 : index
    %3 = vector.load %arg4[%c0_3, %c0_4] : memref<1x32xf32, #tpu.memory_space<vmem>>, vector<1x32xf32>
    %4 = vector.broadcast %3 : vector<1x32xf32> to vector<16x32xf32>
    %5 = arith.addf %2, %4 : vector<16x32xf32>
    %c0_5 = arith.constant 0 : index
    %c0_6 = arith.constant 0 : index
    %6 = vector.load %arg2[%c0_5, %c0_6] : memref<16x32xf32, #tpu.memory_space<vmem>>, vector<16x32xf32>
    %7 = arith.addf %5, %6 : vector<16x32xf32>
    %cst_7 = arith.constant dense<0.000000e+00> : vector<16xf32>
    %8 = vector.multi_reduction <add>, %7, %cst_7 [1] : vector<16x32xf32> to vector<16xf32>
    %9 = vector.shape_cast %8 : vector<16xf32> to vector<16x1xf32>
    %cst_8 = arith.constant 3.200000e+01 : f32
    %10 = vector.broadcast %cst_8 : f32 to vector<16x1xf32>
    %11 = arith.divf %9, %10 : vector<16x1xf32>
    %12 = vector.broadcast %11 : vector<16x1xf32> to vector<16x32xf32>
    %13 = arith.subf %7, %12 : vector<16x32xf32>
    %14 = arith.mulf %13, %13 : vector<16x32xf32>
    %cst_9 = arith.constant dense<0.000000e+00> : vector<16xf32>
    %15 = vector.multi_reduction <add>, %14, %cst_9 [1] : vector<16x32xf32> to vector<16xf32>
    %16 = vector.shape_cast %15 : vector<16xf32> to vector<16x1xf32>
    %cst_10 = arith.constant 3.200000e+01 : f32
    %17 = vector.broadcast %cst_10 : f32 to vector<16x1xf32>
    %18 = arith.divf %16, %17 : vector<16x1xf32>
    %cst_11 = arith.constant 9.99999996E-13 : f32
    %19 = vector.broadcast %cst_11 : f32 to vector<16x1xf32>
    %20 = arith.addf %18, %19 : vector<16x1xf32>
    %21 = math.rsqrt %20 : vector<16x1xf32>
    %c0_12 = arith.constant 0 : index
    %c0_13 = arith.constant 0 : index
    %22 = vector.load %arg5[%c0_12, %c0_13] : memref<1x32xf32, #tpu.memory_space<vmem>>, vector<1x32xf32>
    %23 = vector.broadcast %21 : vector<16x1xf32> to vector<16x32xf32>
    %24 = vector.broadcast %22 : vector<1x32xf32> to vector<16x32xf32>
    %25 = arith.mulf %23, %24 : vector<16x32xf32>
    %26 = arith.mulf %13, %25 : vector<16x32xf32>
    %c0_14 = arith.constant 0 : index
    %c0_15 = arith.constant 0 : index
    %27 = vector.load %arg6[%c0_14, %c0_15] : memref<1x32xf32, #tpu.memory_space<vmem>>, vector<1x32xf32>
    %28 = vector.broadcast %27 : vector<1x32xf32> to vector<16x32xf32>
    %29 = arith.addf %26, %28 : vector<16x32xf32>
    %c0_16 = arith.constant 0 : index
    %c0_17 = arith.constant 0 : index
    %30 = vector.load %arg7[%c0_16, %c0_17] : memref<16x32xf32, #tpu.memory_space<vmem>>, vector<16x32xf32>
    tpu.vector_store %arg7[%c0_16, %c0_17], %29 {strides = array<i32>} : memref<16x32xf32, #tpu.memory_space<vmem>>, vector<16x32xf32>,
    return
  }
  func.func @transform_0(%arg0: i32) -> (i32, i32) {
    %c0_i32 = arith.constant 0 : i32
    %c0_i32_0 = arith.constant 0 : i32
    return %arg0, %c0_i32 : i32, i32
  }
  func.func @transform_1(%arg0: i32) -> (i32, i32) {
    %c0_i32 = arith.constant 0 : i32
    %c0_i32_0 = arith.constant 0 : i32
    return %arg0, %c0_i32 : i32, i32
  }
  func.func @transform_2(%arg0: i32) -> (i32, i32) {
    %c0_i32 = arith.constant 0 : i32
    %c0_i32_0 = arith.constant 0 : i32
    %c0_i32_1 = arith.constant 0 : i32
    return %c0_i32, %c0_i32_0 : i32, i32
  }
  func.func @transform_3(%arg0: i32) -> (i32, i32) {
    %c0_i32 = arith.constant 0 : i32
    %c0_i32_0 = arith.constant 0 : i32
    %c0_i32_1 = arith.constant 0 : i32
    return %c0_i32, %c0_i32_0 : i32, i32
  }
  func.func @transform_4(%arg0: i32) -> (i32, i32) {
    %c0_i32 = arith.constant 0 : i32
    %c0_i32_0 = arith.constant 0 : i32
    %c0_i32_1 = arith.constant 0 : i32
    return %c0_i32, %c0_i32_0 : i32, i32
  }
  func.func @transform_5(%arg0: i32) -> (i32, i32) {
    %c0_i32 = arith.constant 0 : i32
    %c0_i32_0 = arith.constant 0 : i32
    %c0_i32_1 = arith.constant 0 : i32
    return %c0_i32, %c0_i32_0 : i32, i32
  }
  func.func @transform_6(%arg0: i32) -> (i32, i32) {
    %c0_i32 = arith.constant 0 : i32
    %c0_i32_0 = arith.constant 0 : i32
    return %arg0, %c0_i32 : i32, i32
  }
}

</mosaic_0001>

<llo_original>
// kernel: tpu_custom_call.1
$region0: #{tpu_custom_call.1}
  #allocation0 [shape = 'u32[]', space=smem, size = 0x4, offset = 0x4, fixed_abs, tag = 'smem constant byte address 0x4 - core index']
  #allocation1 [shape = 'u32[144,128]{1,0:T(1,128)}', space=vmem, size = 0x12000, scoped, tag = 'internal scratch']
  %s0 = inlined_call_operand.hbm [shape: f32[16,32], index: 0, kind: input, shape index: {}]
  %s1 = inlined_call_operand.hbm [shape: f32[16,32], index: 1, kind: input, shape index: {}]
  %s2 = inlined_call_operand.hbm [shape: f32[32,32], index: 2, kind: input, shape index: {}]
  %s3 = inlined_call_operand.hbm [shape: f32[1,32], index: 3, kind: input, shape index: {}]
  %s4 = inlined_call_operand.hbm [shape: f32[1,32], index: 4, kind: input, shape index: {}]
  %s5 = inlined_call_operand.hbm [shape: f32[1,32], index: 5, kind: input, shape index: {}]
  %s6 = inlined_call_operand.hbm [shape: f32[16,32], index: 6, kind: output, shape index: {}]
  %s7 = sld [smem:[#allocation0]]
  $region58: #{tpu_custom_call.1} parent=0
    _
  %s9 = ssub.s32 1, %s7
  %s10 = scalar_select 0, %s9, %s7
  $region1: #{tpu_custom_call.1} parent=0
    #allocation2 [shape = 'u8[8192]{0}', space=vmem, size = 0x2000, scoped, tag = 'input window, operand 0, single buffered']
    #allocation3 [shape = 's32[1]{0}', space=sflag, size = 0x4, scoped, tag = 'scoped memory for tpu_custom_call.1']
    #allocation4 [shape = 's32[1]{0}', space=sflag, size = 0x4, scoped, tag = 'scoped memory for tpu_custom_call.1']
    #allocation5 [shape = 'u8[8192]{0}', space=vmem, size = 0x2000, scoped, tag = 'input window, operand 1, single buffered']
    #allocation6 [shape = 's32[1]{0}', space=sflag, size = 0x4, scoped, tag = 'scoped memory for tpu_custom_call.1']
    #allocation7 [shape = 'u8[16384]{0}', space=vmem, size = 0x4000, scoped, tag = 'input window, operand 2, single buffered']
    #allocation8 [shape = 'u8[512]{0}', space=vmem, size = 0x400, scoped, tag = 'input window, operand 3, single buffered']
    #allocation9 [shape = 's32[1]{0}', space=sflag, size = 0x4, scoped, tag = 'scoped memory for tpu_custom_call.1']
    #allocation10 [shape = 'u8[512]{0}', space=vmem, size = 0x400, scoped, tag = 'input window, operand 4, single buffered']
    #allocation11 [shape = 'u8[512]{0}', space=vmem, size = 0x400, scoped, tag = 'input window, operand 5, single buffered']
    #allocation12 [shape = 's32[1]{0}', space=sflag, size = 0x4, scoped, tag = 'scoped memory for tpu_custom_call.1']
    #allocation13 [shape = 'u8[8192]{0}', space=vmem, size = 0x2000, scoped, tag = 'output window, operand 0, single buffered']
    %11 = vsyncpa [#allocation3], 0
    %12 = vsyncpa [#allocation6], 0
    %13 = vsyncpa [#allocation9], 0
    %14 = vsyncpa [#allocation12], 0
    %15 = vsyncpa [#allocation4], 0
    // Predicated region
    $region2: #{tpu_custom_call.1} parent=1 // pred_check
      _
    $region3: #{tpu_custom_call.1} parent=1 // pred_check_branch
      %17 = sbr.rel (0) target = $region5
    $region4: #{tpu_custom_call.1} parent=1 // pred_region
      %s19 = ssub.s32 256, 256
      %20 = vsyncadd [#allocation3], %s19
      %s21 = sshll.u32 [#allocation2], 4
      %s22 = int_to_ptr.vmem [resolvable:$true] %s21
      %27 = dma.hbm_to_vmem [thread:$0]  %s0, 256, %s22, [#allocation3], 128, 128, 8
    $region5: #{tpu_custom_call.1} parent=1 // pred_fallthru
      _
    // Predicated region
    $region6: #{tpu_custom_call.1} parent=1 // pred_check
      _
    $region7: #{tpu_custom_call.1} parent=1 // pred_check_branch
      %29 = sbr.rel (0) target = $region9
    $region8: #{tpu_custom_call.1} parent=1 // pred_region
      %s31 = ssub.s32 256, 256
      %32 = vsyncadd [#allocation6], %s31
      %s33 = sshll.u32 [#allocation5], 4
      %s34 = int_to_ptr.vmem [resolvable:$true] %s33
      %39 = dma.hbm_to_vmem [thread:$0]  %s1, 256, %s34, [#allocation6], 128, 128, 8
    $region9: #{tpu_custom_call.1} parent=1 // pred_fallthru
      _
    // Predicated region
    $region10: #{tpu_custom_call.1} parent=1 // pred_check
      _
    $region11: #{tpu_custom_call.1} parent=1 // pred_check_branch
      %41 = sbr.rel (0) target = $region13
    $region12: #{tpu_custom_call.1} parent=1 // pred_region
      %s43 = ssub.s32 512, 512
      %44 = vsyncadd [#allocation6], %s43
      %s45 = sshll.u32 [#allocation7], 4
      %s46 = int_to_ptr.vmem [resolvable:$true] %s45
      %51 = dma.hbm_to_vmem [thread:$0]  %s2, 512, %s46, [#allocation6], 128, 128, 8
    $region13: #{tpu_custom_call.1} parent=1 // pred_fallthru
      _
    // Predicated region
    $region14: #{tpu_custom_call.1} parent=1 // pred_check
      _
    $region15: #{tpu_custom_call.1} parent=1 // pred_check_branch
      %53 = sbr.rel (0) target = $region17
    $region16: #{tpu_custom_call.1} parent=1 // pred_region
      %s55 = ssub.s32 16, 16
      %56 = vsyncadd [#allocation9], %s55
      %s58 = sshll.u32 [#allocation8], 4
      %s59 = int_to_ptr.vmem [resolvable:$true] %s58
      %61 = dma.hbm_to_vmem [thread:$0]  %s3, 16, %s59, [#allocation9]
    $region17: #{tpu_custom_call.1} parent=1 // pred_fallthru
      _
    // Predicated region
    $region18: #{tpu_custom_call.1} parent=1 // pred_check
      _
    $region19: #{tpu_custom_call.1} parent=1 // pred_check_branch
      %63 = sbr.rel (0) target = $region21
    $region20: #{tpu_custom_call.1} parent=1 // pred_region
      %s65 = ssub.s32 16, 16
      %66 = vsyncadd [#allocation9], %s65
      %s68 = sshll.u32 [#allocation10], 4
      %s69 = int_to_ptr.vmem [resolvable:$true] %s68
      %71 = dma.hbm_to_vmem [thread:$0]  %s4, 16, %s69, [#allocation9]
    $region21: #{tpu_custom_call.1} parent=1 // pred_fallthru
      _
    // Predicated region
    $region22: #{tpu_custom_call.1} parent=1 // pred_check
      _
    $region23: #{tpu_custom_call.1} parent=1 // pred_check_branch
      %73 = sbr.rel (0) target = $region25
    $region24: #{tpu_custom_call.1} parent=1 // pred_region
      %s75 = ssub.s32 16, 16
      %76 = vsyncadd [#allocation12], %s75
      %s78 = sshll.u32 [#allocation11], 4
      %s79 = int_to_ptr.vmem [resolvable:$true] %s78
      %81 = dma.hbm_to_vmem [thread:$0]  %s5, 16, %s79, [#allocation12]
    $region25: #{tpu_custom_call.1} parent=1 // pred_fallthru
      _
    // Predicated region
    $region26: #{tpu_custom_call.1} parent=1 // pred_check
      _
    $region27: #{tpu_custom_call.1} parent=1 // pred_check_branch
      %83 = sbr.rel (0) target = $region29
    $region28: #{tpu_custom_call.1} parent=1 // pred_region
      %84 = dma.done [#allocation3], 256
    $region29: #{tpu_custom_call.1} parent=1 // pred_fallthru
      _
    // Predicated region
    $region30: #{tpu_custom_call.1} parent=1 // pred_check
      _
    $region31: #{tpu_custom_call.1} parent=1 // pred_check_branch
      %86 = sbr.rel (0) target = $region33
    $region32: #{tpu_custom_call.1} parent=1 // pred_region
      %87 = dma.done [#allocation6], 256
    $region33: #{tpu_custom_call.1} parent=1 // pred_fallthru
      _
    // Predicated region
    $region34: #{tpu_custom_call.1} parent=1 // pred_check
      _
    $region35: #{tpu_custom_call.1} parent=1 // pred_check_branch
      %89 = sbr.rel (0) target = $region37
    $region36: #{tpu_custom_call.1} parent=1 // pred_region
      %90 = dma.done [#allocation6], 512
    $region37: #{tpu_custom_call.1} parent=1 // pred_fallthru
      _
    // Predicated region
    $region38: #{tpu_custom_call.1} parent=1 // pred_check
      _
    $region39: #{tpu_custom_call.1} parent=1 // pred_check_branch
      %92 = sbr.rel (0) target = $region41
    $region40: #{tpu_custom_call.1} parent=1 // pred_region
      %93 = dma.done [#allocation9], 16
    $region41: #{tpu_custom_call.1} parent=1 // pred_fallthru
      _
    // Predicated region
    $region42: #{tpu_custom_call.1} parent=1 // pred_check
      _
    $region43: #{tpu_custom_call.1} parent=1 // pred_check_branch
      %95 = sbr.rel (0) target = $region45
    $region44: #{tpu_custom_call.1} parent=1 // pred_region
      %96 = dma.done [#allocation9], 16
    $region45: #{tpu_custom_call.1} parent=1 // pred_fallthru
      _
    // Predicated region
    $region46: #{tpu_custom_call.1} parent=1 // pred_check
      _
    $region47: #{tpu_custom_call.1} parent=1 // pred_check_branch
      %98 = sbr.rel (0) target = $region49
    $region48: #{tpu_custom_call.1} parent=1 // pred_region
      %99 = dma.done [#allocation12], 16
    $region49: #{tpu_custom_call.1} parent=1 // pred_fallthru
      _
    %v100 = vld [vmem:[#allocation2] sm:$0xff]
    %v101 = vld [vmem:[#allocation2 + $0x8] sm:$0xff]
    %v102 = vld [vmem:[#allocation7] sm:$0xff]
    %v103 = vld [vmem:[#allocation7 + $0x8] sm:$0xff]
    %v104 = vld [vmem:[#allocation7 + $0x10] sm:$0xff]
    %v105 = vld [vmem:[#allocation7 + $0x18] sm:$0xff]
    %v106 = vld [vmem:[#allocation8] sm:$0x1]
    %v108 = vlaneseq
    %v109 = vshrl.u32 %v108, 7
    %v110 = vsub.s32 0, %v109
    %v111 = vrot.slane %v106, %v110
    %vm113 = vcmask 261120
    %v115 = vsel %vm113, %v100, 0
    %v118 = vsel %vm113, %v101, 0
    %v121 = vsel %vm113, %v102, 0
    %v124 = vsel %vm113, %v103, 0
    %v127 = vsel %vm113, %v104, 0
    %v130 = vsel %vm113, %v105, 0
    %132 = vmatprep.subr.mxu0 0.0
    %133 = vmatpush1.xpose.msra.mxu0 %v121
    %134 = vmatprep.subr.mxu0 0.0
    %135 = vmatpush1.xpose.msra.mxu0 %v124
    %136 = vmatprep.subr.mxu0 0.0
    %137 = vmatpush1.xpose.msra.mxu0 %v127
    %138 = vmatprep.subr.mxu0 0.0
    %139 = vmatpush1.xpose.msra.mxu0 %v130
    %140 = vmatprep.subr.mxu0 0.0
    %141 = vmatpush1.xpose.msra.mxu0 0.0
    %142 = vmatprep.subr.mxu0 0.0
    %143 = vmatpush1.xpose.msra.mxu0 0.0
    %144 = vmatprep.subr.mxu0 0.0
    %145 = vmatpush1.xpose.msra.mxu0 0.0
    %146 = vmatprep.subr.mxu0 0.0
    %147 = vmatpush1.xpose.msra.mxu0 0.0
    %148 = vmatprep.subr.mxu0 0.0
    %149 = vmatpush1.xpose.msra.mxu0 0.0
    %150 = vmatprep.subr.mxu0 0.0
    %151 = vmatpush1.xpose.msra.mxu0 0.0
    %152 = vmatprep.subr.mxu0 0.0
    %153 = vmatpush1.xpose.msra.mxu0 0.0
    %154 = vmatprep.subr.mxu0 0.0
    %155 = vmatpush1.xpose.msra.mxu0 0.0
    %156 = vmatprep.subr.mxu0 0.0
    %157 = vmatpush1.xpose.msra.mxu0 0.0
    %158 = vmatprep.subr.mxu0 0.0
    %159 = vmatpush1.xpose.msra.mxu0 0.0
    %160 = vmatprep.subr.mxu0 0.0
    %161 = vmatpush1.xpose.msra.mxu0 0.0
    %162 = vmatprep.subr.mxu0 0.0
    %163 = vmatpush1.xpose.msra.mxu0 0.0
    %164 = vmatprep.subr.mxu0 0.0
    %165 = vmatpush1.xpose.msra.mxu0 0.0
    %166 = vmatprep.subr.mxu0 0.0
    %167 = vmatpush1.xpose.msra.mxu0 0.0
    %168 = vmatprep.subr.mxu0 0.0
    %169 = vmatpush1.xpose.msra.mxu0 0.0
    %170 = vmatprep.subr.mxu0 0.0
    %171 = vmatpush1.xpose.msra.mxu0 0.0
    %172 = vmatprep.subr.mxu0 0.0
    %173 = vmatpush1.xpose.msra.mxu0 0.0
    %174 = vmatprep.subr.mxu0 0.0
    %175 = vmatpush1.xpose.msra.mxu0 0.0
    %176 = vmatprep.subr.mxu0 0.0
    %177 = vmatpush1.xpose.msra.mxu0 0.0
    %178 = vmatprep.subr.mxu0 0.0
    %179 = vmatpush1.xpose.msra.mxu0 0.0
    %180 = vmatprep.subr.mxu0 0.0
    %181 = vmatpush1.xpose.msra.mxu0 0.0
    %182 = vmatprep.subr.mxu0 0.0
    %183 = vmatpush1.xpose.msra.mxu0 0.0
    %184 = vmatprep.subr.mxu0 0.0
    %185 = vmatpush1.xpose.msra.mxu0 0.0
    %186 = vmatprep.subr.mxu0 0.0
    %187 = vmatpush1.xpose.msra.mxu0 0.0
    %188 = vmatprep.subr.mxu0 0.0
    %189 = vmatpush1.xpose.msra.mxu0 0.0
    %190 = vmatprep.subr.mxu0 0.0
    %191 = vmatpush1.xpose.msra.mxu0 0.0
    %192 = vmatprep.subr.mxu0 0.0
    %193 = vmatpush1.xpose.msra.mxu0 0.0
    %194 = vmatprep.subr.mxu0 0.0
    %195 = vmatpush1.xpose.msra.mxu0 0.0
    %196 = vmatprep.mubr.f32.mxu0 0.0
    %197 = vmatmul.mubr.f32.gmra.mrb[0].mxu0 %v115
    %v198 = vpop.f32.mrb[0].mxu0
    %v199 = vadd.f32 %v111, %v198
    %v200 = vpop.f32.mrb[0].mxu0
    %201 = vmatprep.mubr.f32.mxu0 0.0
    %202 = vmatmul.mubr.f32.gmra.mrb[0].mxu0 %v118
    %v203 = vpop.f32.mrb[0].mxu0
    %v204 = vadd.f32 %v111, %v203
    %v205 = vpop.f32.mrb[0].mxu0
    %206 = vdwg.mxu0
    %v207 = vld [vmem:[#allocation5] sm:$0xff]
    %v208 = vld [vmem:[#allocation5 + $0x8] sm:$0xff]
    %v209 = vadd.f32 %v199, %v207
    %v210 = vadd.f32 %v204, %v208
    %v211 = vsel %vm113, %v209, 0.0
    %212 = vadd.xlane.f32.xlu0 %v211
    %v213 = vpop.xlane.xlu0 %212
    %v214 = vsel %vm113, %v210, 0.0
    %215 = vadd.xlane.f32.xlu0 %v214
    %v216 = vpop.xlane.xlu0 %215
    %v217 = vrcp.pop 32.0
    %v218 = vmul.f32 %v213, %v217
    %v219 = vmul.f32 %v216, %v217
    %v220 = vsub.f32 %v209, %v218
    %v221 = vsub.f32 %v210, %v219
    %v222 = vmul.f32 %v220, %v220
    %v223 = vmul.f32 %v221, %v221
    %v224 = vsel %vm113, %v222, 0.0
    %225 = vadd.xlane.f32.xlu0 %v224
    %v226 = vpop.xlane.xlu0 %225
    %v227 = vsel %vm113, %v223, 0.0
    %228 = vadd.xlane.f32.xlu0 %v227
    %v229 = vpop.xlane.xlu0 %228
    %v230 = vmul.f32 %v226, %v217
    %v231 = vmul.f32 %v229, %v217
    %v232 = vadd.f32 %v230, 1e-12
    %v233 = vadd.f32 %v231, 1e-12
    %v234 = vrsqrt.pop %v232
    %v235 = vrsqrt.pop %v233
    %v236 = vld [vmem:[#allocation10] sm:$0x1]
    %v238 = vlaneseq
    %v239 = vshrl.u32 %v238, 7
    %v240 = vsub.s32 0, %v239
    %v241 = vrot.slane %v236, %v240
    %v243 = vmul.f32 %v234, %v241
    %v244 = vmul.f32 %v235, %v241
    %v245 = vmul.f32 %v220, %v243
    %v246 = vmul.f32 %v221, %v244
    %v247 = vld [vmem:[#allocation11] sm:$0x1]
    %v249 = vlaneseq
    %v250 = vshrl.u32 %v249, 7
    %v251 = vsub.s32 0, %v250
    %v252 = vrot.slane %v247, %v251
    %v254 = vadd.f32 %v245, %v252
    %v255 = vadd.f32 %v246, %v252
    %256 = vst.msk [vmem:[#allocation13] sm:$0xff] %vm113, %v254
    %257 = vst.msk [vmem:[#allocation13 + $0x8] sm:$0xff] %vm113, %v255
    // Predicated region
    $region50: #{tpu_custom_call.1} parent=1 // pred_check
      _
    $region51: #{tpu_custom_call.1} parent=1 // pred_check_branch
      %259 = sbr.rel (0) target = $region53
    $region52: #{tpu_custom_call.1} parent=1 // pred_region
      %s261 = ssub.s32 256, 256
      %262 = vsyncadd [#allocation4], %s261
      %s263 = sshll.u32 [#allocation13], 4
      %s264 = int_to_ptr.vmem [resolvable:$true] %s263
      %269 = dma.vmem_to_hbm [thread:$0]  %s264, 256, %s6, [#allocation4], 128, 128, 8
    $region53: #{tpu_custom_call.1} parent=1 // pred_fallthru
      _
    // Predicated region
    $region54: #{tpu_custom_call.1} parent=1 // pred_check
      _
    $region55: #{tpu_custom_call.1} parent=1 // pred_check_branch
      %271 = sbr.rel (0) target = $region57
    $region56: #{tpu_custom_call.1} parent=1 // pred_region
      %272 = dma.done [#allocation4], 256
    $region57: #{tpu_custom_call.1} parent=1 // pred_fallthru
      _
    %273 = vsyncpa [#allocation3], 1
    %274 = vsyncpa [#allocation6], 1
    %275 = vsyncpa [#allocation9], 1
    %276 = vsyncpa [#allocation12], 1
    %277 = vsyncpa [#allocation4], 1

</llo_original>
